<compile_context>
chip_gen: v7x
topology: tpu7x:2x2x1
jax: 0.10.0
libtpu: 0.0.40
codegen_flags: <defaults>
</compile_context>

<pallas_src>
import math
import functools

import jax
import jax.numpy as jnp
from jax.experimental import pallas as pl
from jax.experimental.pallas import tpu as pltpu


# ----------------------------------------------------------------------------
# helpers
# ----------------------------------------------------------------------------

def _round_up(x, m):
    return (x + m - 1) // m * m


def _choose_tm(M, kcin, cout, cin_res, has_res):
    """Pick a row tile: as large as a conservative VMEM budget allows,
    capped at 1024 rows, multiple of 16 (bf16 sublane packing), never larger
    than the (rounded-up) problem size.  Auto-shrinks on v7x (64 MiB VMEM)."""
    per_row = 2 * (kcin * 2 + cout * 4 + (cin_res * 4 if has_res else 0))  # dbl-buffered
    try:
        vmem = pltpu.get_tpu_info().vmem_capacity_bytes
    except Exception:
        vmem = 64 << 20
    budget = vmem // 8                      # leave plenty of headroom vs scoped limit
    tm = min(1024, max(16, budget // max(per_row, 1)))
    tm = max(16, (tm // 16) * 16)
    tm = min(tm, _round_up(M, 16))
    return tm


# ----------------------------------------------------------------------------
# Pallas kernels: fused (K-tap) conv + GLU, optional residual/scale epilogue
# ----------------------------------------------------------------------------

def _make_kernel(with_residual, scale):
    if with_residual:
        def kernel(x_ref, wa_ref, wg_ref, ba_ref, bg_ref, r_ref, o_ref):
            x = x_ref[...]                                   # (tm, K*Cin) bf16
            a = jnp.dot(x, wa_ref[...], preferred_element_type=jnp.float32) + ba_ref[...]
            g = jnp.dot(x, wg_ref[...], preferred_element_type=jnp.float32) + bg_ref[...]
            y = a * jax.nn.sigmoid(g) + r_ref[...]
            o_ref[...] = (y * scale).astype(o_ref.dtype)
    else:
        def kernel(x_ref, wa_ref, wg_ref, ba_ref, bg_ref, o_ref):
            x = x_ref[...]
            a = jnp.dot(x, wa_ref[...], preferred_element_type=jnp.float32) + ba_ref[...]
            g = jnp.dot(x, wg_ref[...], preferred_element_type=jnp.float32) + bg_ref[...]
            o_ref[...] = ((a * jax.nn.sigmoid(g)) * scale).astype(o_ref.dtype)
    return kernel


def conv_glu_layer(x_btc, lyr, *, residual=None, scale=1.0,
                   out_dtype=jnp.float32, tm=None):
    """One causal/anti-causal dilated Conv1d + GLU layer.

    x_btc   : (B, T, Cin) activations (any float dtype)
    lyr     : dict from prepare_layer (fused bf16 weights, shifts, biases)
    residual: optional (B, T, Cout) f32 tensor added in the kernel epilogue
    scale   : epilogue scale (sqrt(0.5) on the last layer)
    """
    B, T, Cin = x_btc.shape
    shifts = lyr["shifts"]
    K = len(shifts)
    w_a, w_g, b_a, b_g = lyr["w_a"], lyr["w_g"], lyr["b_a"], lyr["b_g"]
    KCin, Cout = w_a.shape
    assert KCin == K * Cin
    if residual is not None:
        assert residual.shape[-1] == Cout

    # Build the K time-shifted copies once, concatenated along channels
    # (one staging array instead of a stack of K).
    # TODO(synk): a halo'd per-tile DMA (pl.Element window) would avoid the
    # K-fold input staging entirely; with bf16 staging the extra traffic is
    # already <= the original single f32 copy.
    def shift_time(x, s):
        if s == 0:
            return x
        if abs(s) >= T:
            return jnp.zeros_like(x)
        z = jnp.zeros((B, abs(s), Cin), x.dtype)
        if s > 0:                             # y[t] = x[t+s]
            return jnp.concatenate([x[:, s:, :], z], axis=1)
        return jnp.concatenate([z, x[:, :s, :]], axis=1)

    x_cat = jnp.concatenate([shift_time(x_btc, s) for s in shifts], axis=-1)

    M = B * T
    if tm is None:
        tm = _choose_tm(M, KCin, Cout, Cout, residual is not None)
    M_pad = _round_up(M, tm)

    x_rows = x_cat.reshape(M, KCin).astype(jnp.bfloat16)
    if M_pad != M:                            # row tail -> zero pad (correct coverage)
        x_rows = jnp.pad(x_rows, ((0, M_pad - M), (0, 0)))

    in_specs = [
        pl.BlockSpec((tm, KCin), lambda i: (i, 0)),
        pl.BlockSpec((KCin, Cout), lambda i: (0, 0)),
        pl.BlockSpec((KCin, Cout), lambda i: (0, 0)),
        pl.BlockSpec((1, Cout), lambda i: (0, 0)),
        pl.BlockSpec((1, Cout), lambda i: (0, 0)),
    ]
    args = [x_rows, w_a, w_g, b_a, b_g]

    if residual is not None:
        r_rows = residual.reshape(M, Cout).astype(jnp.float32)
        if M_pad != M:
            r_rows = jnp.pad(r_rows, ((0, M_pad - M), (0, 0)))
        in_specs.append(pl.BlockSpec((tm, Cout), lambda i: (i, 0)))
        args.append(r_rows)

    kernel = _make_kernel(residual is not None, float(scale))

    out = pl.pallas_call(
        kernel,
        out_shape=jax.ShapeDtypeStruct((M_pad, Cout), out_dtype),
        grid_spec=pltpu.PrefetchScalarGridSpec(
            num_scalar_prefetch=0,
            grid=(M_pad // tm,),
            in_specs=in_specs,
            # TODO(synk): for Cout < 128 the store is still a masked vst; a
            # (tm//4, 4*Cout) row-packed out_spec would make it lane-dense but
            # needs a sublane->lane relayout in-kernel (moot for Cout >= 128).
            out_specs=pl.BlockSpec((tm, Cout), lambda i: (i, 0)),
        ),
        compiler_params=pltpu.CompilerParams(
            dimension_semantics=("parallel",)),
    )(*args)

    return out[:M].reshape(B, T, Cout)


# ----------------------------------------------------------------------------
# Parameters: PyTorch-equivalent init + one-time weight preprocessing
# ----------------------------------------------------------------------------

def init_params(key, input_dim, layers, dropout=0.0):
    """Matches the PyTorch __init__ (weight_norm(dim=0): g initialised to ||v||)."""
    params = []
    last_dim = input_dim
    for idx, layer in enumerate(layers):
        k, cout = layer[0], layer[1]
        conv_dropout = dropout if idx == 0 else 0.0
        std = math.sqrt(4 * (1.0 - conv_dropout) / (k * last_dim))
        key, sub = jax.random.split(key)
        v = jax.random.normal(sub, (cout * 2, last_dim, k), jnp.float32) * std
        g = jnp.sqrt(jnp.sum(v * v, axis=(1, 2)))         # weight_norm init
        b = jnp.zeros((cout * 2,), jnp.float32)
        params.append((v, g, b))
        last_dim = cout
    assert last_dim == input_dim
    return params


def prepare_layer(v, g, b, layer, direction):
    """One-time weight prep: apply weight-norm, flatten the K taps to a
    (K*Cin, 2*Cout) matrix, split into lane-aligned value/gate halves (bf16),
    and derive the per-tap causal/anti-causal time shifts."""
    k, cout = layer[0], layer[1]
    d = layer[2] if len(layer) == 3 else 1
    p = layer[2] if len(layer) == 3 else (layer[0] - 1)     # explicit module padding
    if direction == "forward":     # narrow(2, 0, T)  -> y[t] = sum_j Wj x[t + j*d - p]
        shifts = tuple(j * d - p for j in range(k))
    else:                          # narrow(2, rm, T) -> y[t] = sum_j Wj x[t + j*d + p - d*(k-1)]
        shifts = tuple(j * d + p - d * (k - 1) for j in range(k))

    # weight_norm(dim=0): w = g * v / ||v|| per output channel
    norm = jnp.sqrt(jnp.sum(v * v, axis=(1, 2), keepdims=True))
    w_eff = g.reshape(-1, 1, 1) * v / norm                  # (2*Cout, Cin, K)
    cin = v.shape[1]
    w_fused = jnp.transpose(w_eff, (2, 1, 0)).reshape(k * cin, 2 * cout)
    return dict(
        w_a=w_fused[:, :cout].astype(jnp.bfloat16),
        w_g=w_fused[:, cout:].astype(jnp.bfloat16),
        b_a=b[:cout].reshape(1, cout).astype(jnp.float32),
        b_g=b[cout:].reshape(1, cout).astype(jnp.float32),
        shifts=shifts,
    )


def prepare_params(params, layers, direction):
    assert direction in ("forward", "backward")
    return [prepare_layer(v, g, b, layer, direction)
            for (v, g, b), layer in zip(params, layers)]


# ----------------------------------------------------------------------------
# Forward pass (NCW in / NCW out, like the PyTorch module)
# ----------------------------------------------------------------------------

def residual_block_forward(x_nct, prepared):
    # TODO(synk): training-mode dropout on the first layer not implemented
    # (eval semantics: a no-op in the PyTorch forward).
    x_btc = jnp.transpose(x_nct, (0, 2, 1))                 # NCW -> NTC
    out = x_btc
    n = len(prepared)
    for idx, lyr in enumerate(prepared):
        last = idx == n - 1
        out = conv_glu_layer(
            out, lyr,
            residual=x_btc if last else None,               # fused (out + x) * sqrt(0.5)
            scale=math.sqrt(0.5) if last else 1.0,
            out_dtype=jnp.float32 if last else jnp.bfloat16)
    # TODO(synk): final NTC->NCW transpose left to XLA (could be folded into a
    # per-(batch, time-tile) out_spec with an in-kernel transpose).
    return jnp.transpose(out, (0, 2, 1))


# ----------------------------------------------------------------------------
# Pure-JAX reference mirroring the PyTorch forward (for verification)
# ----------------------------------------------------------------------------

def ref_forward(x_nct, params, layers, direction):
    T = x_nct.shape[2]
    out = x_nct
    for (v, g, b), layer in zip(params, layers):
        k = layer[0]
        d = layer[2] if len(layer) == 3 else 1
        p = layer[2] if len(layer) == 3 else (layer[0] - 1)
        norm = jnp.sqrt(jnp.sum(v * v, axis=(1, 2), keepdims=True))
        w = g.reshape(-1, 1, 1) * v / norm
        conv = jax.lax.conv_general_dilated(
            out, w, window_strides=(1,), padding=[(p, p)],
            rhs_dilation=(d,), dimension_numbers=("NCH", "OIH", "NCH"))
        conv = conv + b[None, :, None]
        rm = conv.shape[2] - T
        if rm > 0:
            conv = conv[:, :, :T] if direction == "forward" else conv[:, :, rm:]
        half = conv.shape[1] // 2
        out = conv[:, :half, :] * jax.nn.sigmoid(conv[:, half:, :])
    return (out + x_nct) * math.sqrt(0.5)


# ----------------------------------------------------------------------------

if __name__ == "__main__":
    input_dim = 32
    layers = [[3, 32], [2, 32, 2]]      # k=3 plain conv, then k=2 dilation=2 conv
    B, T = 2, 8

    key = jax.random.PRNGKey(0)
    kx, kp = jax.random.split(key)
    x = jax.random.normal(kx, (B, input_dim, T), jnp.float32)   # NCW like torch
    params = init_params(kp, input_dim, layers, dropout=0.0)

    for direction in ("forward", "backward"):
        prepared = prepare_params(params, layers, direction)
        fwd = functools.partial(residual_block_forward, prepared=prepared)
        y = jax.block_until_ready(fwd(x))
        y_ref = jax.block_until_ready(ref_forward(x, params, layers, direction))
        assert y.shape == x.shape
        err = float(jnp.max(jnp.abs(y - y_ref)))
        # bf16 MXU inputs -> loose tolerance; catches any shift/layout error.
        assert err < 1e-1, f"{direction}: max abs err {err}"

    print("KERNEL_OK")
</pallas_src>

<mosaic_0001>
module attributes {stable_mosaic.version = 11 : i64} {
  func.func @kernel(%arg0: i32, %arg1: memref<16x96xbf16, #tpu.memory_space<vmem>>, %arg2: memref<96x32xbf16, #tpu.memory_space<vmem>>, %arg3: memref<96x32xbf16, #tpu.memory_space<vmem>>, %arg4: memref<1x32xf32, #tpu.memory_space<vmem>>, %arg5: memref<1x32xf32, #tpu.memory_space<vmem>>, %arg6: memref<16x32xbf16, #tpu.memory_space<vmem>>) attributes {dimension_semantics = [#tpu.dimension_semantics<parallel>], iteration_bounds = array<i64: 1>, scalar_prefetch = 0 : i64, scratch_operands = 0 : i64, tpu.core_type = #tpu.core_type<tc>, window_params = [{transform_indices = @transform_0, window_bounds = array<i64: 16, 96>}, {pipeline_mode = #tpu.pipeline_mode<synchronous>, transform_indices = @transform_1, window_bounds = array<i64: 96, 32>}, {pipeline_mode = #tpu.pipeline_mode<synchronous>, transform_indices = @transform_2, window_bounds = array<i64: 96, 32>}, {pipeline_mode = #tpu.pipeline_mode<synchronous>, transform_indices = @transform_3, window_bounds = array<i64: 1, 32>}, {pipeline_mode = #tpu.pipeline_mode<synchronous>, transform_indices = @transform_4, window_bounds = array<i64: 1, 32>}, {transform_indices = @transform_5, window_bounds = array<i64: 16, 32>}]} {
    %c0 = arith.constant 0 : index
    %c0_0 = arith.constant 0 : index
    %0 = vector.load %arg1[%c0, %c0_0] : memref<16x96xbf16, #tpu.memory_space<vmem>>, vector<16x96xbf16>
    %c0_1 = arith.constant 0 : index
    %c0_2 = arith.constant 0 : index
    %1 = vector.load %arg2[%c0_1, %c0_2] : memref<96x32xbf16, #tpu.memory_space<vmem>>, vector<96x32xbf16>
    %cst = arith.constant dense<0.000000e+00> : vector<16x32xf32>
    %2 = tpu.matmul %0, %1, %cst {dimension_numbers = #tpu.dot_dimension_numbers<[1], [0], [0], [1], [0, 0, 1, 1], [], []>} : vector<16x96xbf16>, vector<96x32xbf16>, vector<16x32xf32> -> vector<16x32xf32>
    %c0_3 = arith.constant 0 : index
    %c0_4 = arith.constant 0 : index
    %3 = vector.load %arg4[%c0_3, %c0_4] : memref<1x32xf32, #tpu.memory_space<vmem>>, vector<1x32xf32>
    %4 = vector.broadcast %3 : vector<1x32xf32> to vector<16x32xf32>
    %5 = arith.addf %2, %4 : vector<16x32xf32>
    %c0_5 = arith.constant 0 : index
    %c0_6 = arith.constant 0 : index
    %6 = vector.load %arg3[%c0_5, %c0_6] : memref<96x32xbf16, #tpu.memory_space<vmem>>, vector<96x32xbf16>
    %cst_7 = arith.constant dense<0.000000e+00> : vector<16x32xf32>
    %7 = tpu.matmul %0, %6, %cst_7 {dimension_numbers = #tpu.dot_dimension_numbers<[1], [0], [0], [1], [0, 0, 1, 1], [], []>} : vector<16x96xbf16>, vector<96x32xbf16>, vector<16x32xf32> -> vector<16x32xf32>
    %c0_8 = arith.constant 0 : index
    %c0_9 = arith.constant 0 : index
    %8 = vector.load %arg5[%c0_8, %c0_9] : memref<1x32xf32, #tpu.memory_space<vmem>>, vector<1x32xf32>
    %9 = vector.broadcast %8 : vector<1x32xf32> to vector<16x32xf32>
    %10 = arith.addf %7, %9 : vector<16x32xf32>
    %11 = arith.negf %10 : vector<16x32xf32>
    %12 = math.exp %11 : vector<16x32xf32>
    %cst_10 = arith.constant 1.000000e+00 : f32
    %13 = vector.broadcast %cst_10 : f32 to vector<16x32xf32>
    %14 = arith.addf %13, %12 : vector<16x32xf32>
    %15 = arith.divf %13, %14 : vector<16x32xf32>
    %16 = arith.mulf %5, %15 : vector<16x32xf32>
    %cst_11 = arith.constant 1.000000e+00 : f32
    %17 = vector.broadcast %cst_11 : f32 to vector<16x32xf32>
    %18 = arith.mulf %16, %17 : vector<16x32xf32>
    %19 = arith.truncf %18 : vector<16x32xf32> to vector<16x32xbf16>
    %c0_12 = arith.constant 0 : index
    %c0_13 = arith.constant 0 : index
    %20 = vector.load %arg6[%c0_12, %c0_13] : memref<16x32xbf16, #tpu.memory_space<vmem>>, vector<16x32xbf16>
    tpu.vector_store %arg6[%c0_12, %c0_13], %19 {strides = array<i32>} : memref<16x32xbf16, #tpu.memory_space<vmem>>, vector<16x32xbf16>,
    return
  }
  func.func @transform_0(%arg0: i32) -> (i32, i32) {
    %c0_i32 = arith.constant 0 : i32
    %c0_i32_0 = arith.constant 0 : i32
    return %arg0, %c0_i32 : i32, i32
  }
  func.func @transform_1(%arg0: i32) -> (i32, i32) {
    %c0_i32 = arith.constant 0 : i32
    %c0_i32_0 = arith.constant 0 : i32
    %c0_i32_1 = arith.constant 0 : i32
    return %c0_i32, %c0_i32_0 : i32, i32
  }
  func.func @transform_2(%arg0: i32) -> (i32, i32) {
    %c0_i32 = arith.constant 0 : i32
    %c0_i32_0 = arith.constant 0 : i32
    %c0_i32_1 = arith.constant 0 : i32
    return %c0_i32, %c0_i32_0 : i32, i32
  }
  func.func @transform_3(%arg0: i32) -> (i32, i32) {
    %c0_i32 = arith.constant 0 : i32
    %c0_i32_0 = arith.constant 0 : i32
    %c0_i32_1 = arith.constant 0 : i32
    return %c0_i32, %c0_i32_0 : i32, i32
  }
  func.func @transform_4(%arg0: i32) -> (i32, i32) {
    %c0_i32 = arith.constant 0 : i32
    %c0_i32_0 = arith.constant 0 : i32
    %c0_i32_1 = arith.constant 0 : i32
    return %c0_i32, %c0_i32_0 : i32, i32
  }
  func.func @transform_5(%arg0: i32) -> (i32, i32) {
    %c0_i32 = arith.constant 0 : i32
    %c0_i32_0 = arith.constant 0 : i32
    return %arg0, %c0_i32 : i32, i32
  }
}

</mosaic_0001>

<llo_original>
// kernel: tpu_custom_call.1
$region0: #{tpu_custom_call.1}
  #allocation0 [shape = 'u32[]', space=smem, size = 0x4, offset = 0x4, fixed_abs, tag = 'smem constant byte address 0x4 - core index']
  #allocation1 [shape = 'u32[144,128]{1,0:T(1,128)}', space=vmem, size = 0x12000, scoped, tag = 'internal scratch']
  %s0 = inlined_call_operand.vmem [shape: bf16[16,96], index: 0, kind: input, shape index: {}]
  %s1 = inlined_call_operand.vmem [shape: bf16[96,32], index: 1, kind: input, shape index: {}]
  %s2 = inlined_call_operand.vmem [shape: bf16[96,32], index: 2, kind: input, shape index: {}]
  %s3 = inlined_call_operand.vmem [shape: f32[1,32], index: 3, kind: input, shape index: {}]
  %s4 = inlined_call_operand.vmem [shape: f32[1,32], index: 4, kind: input, shape index: {}]
  %s5 = inlined_call_operand.hbm [shape: bf16[16,32], index: 5, kind: output, shape index: {}]
  %s6 = sld [smem:[#allocation0]]
  $region30: #{tpu_custom_call.1} parent=0
    _
  %s8 = ssub.s32 1, %s6
  %s9 = scalar_select 0, %s8, %s6
  $region1: #{tpu_custom_call.1} parent=0
    #allocation2 [shape = 'u8[4096]{0}', space=vmem, size = 0x1000, scoped, tag = 'output window, operand 0, single buffered']
    #allocation3 [shape = 's32[1]{0}', space=sflag, size = 0x4, scoped, tag = 'scoped memory for tpu_custom_call.1']
    %10 = vsyncpa [#allocation3], 0
    // Predicated region
    $region2: #{tpu_custom_call.1} parent=1 // pred_check
      _
    $region3: #{tpu_custom_call.1} parent=1 // pred_check_branch
      %12 = sbr.rel (0) target = $region5
    $region4: #{tpu_custom_call.1} parent=1 // pred_region
      _
    $region5: #{tpu_custom_call.1} parent=1 // pred_fallthru
      _
    // Predicated region
    $region6: #{tpu_custom_call.1} parent=1 // pred_check
      _
    $region7: #{tpu_custom_call.1} parent=1 // pred_check_branch
      %14 = sbr.rel (0) target = $region9
    $region8: #{tpu_custom_call.1} parent=1 // pred_region
      _
    $region9: #{tpu_custom_call.1} parent=1 // pred_fallthru
      _
    // Predicated region
    $region10: #{tpu_custom_call.1} parent=1 // pred_check
      _
    $region11: #{tpu_custom_call.1} parent=1 // pred_check_branch
      %16 = sbr.rel (0) target = $region13
    $region12: #{tpu_custom_call.1} parent=1 // pred_region
      _
    $region13: #{tpu_custom_call.1} parent=1 // pred_fallthru
      _
    // Predicated region
    $region14: #{tpu_custom_call.1} parent=1 // pred_check
      _
    $region15: #{tpu_custom_call.1} parent=1 // pred_check_branch
      %18 = sbr.rel (0) target = $region17
    $region16: #{tpu_custom_call.1} parent=1 // pred_region
      _
    $region17: #{tpu_custom_call.1} parent=1 // pred_fallthru
      _
    // Predicated region
    $region18: #{tpu_custom_call.1} parent=1 // pred_check
      _
    $region19: #{tpu_custom_call.1} parent=1 // pred_check_branch
      %20 = sbr.rel (0) target = $region21
    $region20: #{tpu_custom_call.1} parent=1 // pred_region
      _
    $region21: #{tpu_custom_call.1} parent=1 // pred_fallthru
      _
    %v22 = vld [vmem:[%s0] sm:$0xf]
    %v23 = vld [vmem:[%s0 + $0x4] sm:$0xf]
    %v24 = vld [vmem:[%s1] sm:$0xf]
    %v25 = vld [vmem:[%s1 + $0x4] sm:$0xf]
    %v26 = vld [vmem:[%s1 + $0x8] sm:$0xf]
    %v27 = vld [vmem:[%s1 + $0xc] sm:$0xf]
    %v28 = vld [vmem:[%s1 + $0x10] sm:$0xf]
    %v29 = vld [vmem:[%s1 + $0x14] sm:$0xf]
    %v30 = vld [vmem:[%s1 + $0x18] sm:$0xf]
    %v31 = vld [vmem:[%s1 + $0x1c] sm:$0xf]
    %v32 = vld [vmem:[%s1 + $0x20] sm:$0xf]
    %v33 = vld [vmem:[%s1 + $0x24] sm:$0xf]
    %v34 = vld [vmem:[%s1 + $0x28] sm:$0xf]
    %v35 = vld [vmem:[%s1 + $0x2c] sm:$0xf]
    %v36 = vld [vmem:[%s3] sm:$0x1]
    %v38 = vlaneseq
    %v39 = vshrl.u32 %v38, 7
    %v40 = vsub.s32 0, %v39
    %v41 = vrot.slane %v36, %v40
    %v45 = vunpack.c.l.b16 %v22
    %v46 = vunpack.c.l.b16 %v23
    %v47 = vpack.c.b16 %v46, %v45
    %v60 = vunpack.c.l.b16 %v24
    %v61 = vunpack.c.l.b16 %v25
    %v62 = vunpack.c.l.b16 %v26
    %v63 = vunpack.c.l.b16 %v27
    %v64 = vunpack.c.l.b16 %v28
    %v65 = vunpack.c.l.b16 %v29
    %v66 = vunpack.c.l.b16 %v30
    %v67 = vunpack.c.l.b16 %v31
    %v68 = vunpack.c.l.b16 %v32
    %v69 = vunpack.c.l.b16 %v33
    %v70 = vunpack.c.l.b16 %v34
    %v71 = vunpack.c.l.b16 %v35
    %v72 = vpack.c.b16 %v61, %v60
    %v73 = vpack.c.b16 %v63, %v62
    %v74 = vpack.c.b16 %v65, %v64
    %v75 = vpack.c.b16 %v67, %v66
    %v76 = vpack.c.b16 %v69, %v68
    %v77 = vpack.c.b16 %v71, %v70
    %vm84 = vcmask 785408
    %v86 = vsel %vm84, %v47, 0
    %88 = vmatprep.subr.bf16.mxu0 0
    %89 = vmatpush1.bf16.msra.mxu0 %v72
    %90 = vmatprep.subr.bf16.mxu0 0
    %91 = vmatpush1.bf16.msra.mxu0 %v73
    %92 = vmatprep.subr.bf16.mxu0 0
    %93 = vmatpush1.bf16.msra.mxu0 %v74
    %94 = vmatprep.subr.bf16.mxu0 0
    %95 = vmatpush1.bf16.msra.mxu0 %v75
    %96 = vmatprep.subr.bf16.mxu0 0
    %97 = vmatpush1.bf16.msra.mxu0 %v76
    %98 = vmatprep.subr.bf16.mxu0 0
    %99 = vmatpush1.bf16.msra.mxu0 %v77
    %100 = vmatprep.subr.bf16.mxu0 0
    %101 = vmatpush1.bf16.msra.mxu0 0
    %102 = vmatprep.subr.bf16.mxu0 0
    %103 = vmatpush1.bf16.msra.mxu0 0
    %104 = vmatprep.subr.bf16.mxu0 0
    %105 = vmatpush1.bf16.msra.mxu0 0
    %106 = vmatprep.subr.bf16.mxu0 0
    %107 = vmatpush1.bf16.msra.mxu0 0
    %108 = vmatprep.subr.bf16.mxu0 0
    %109 = vmatpush1.bf16.msra.mxu0 0
    %110 = vmatprep.subr.bf16.mxu0 0
    %111 = vmatpush1.bf16.msra.mxu0 0
    %112 = vmatprep.subr.bf16.mxu0 0
    %113 = vmatpush1.bf16.msra.mxu0 0
    %114 = vmatprep.subr.bf16.mxu0 0
    %115 = vmatpush1.bf16.msra.mxu0 0
    %116 = vmatprep.subr.bf16.mxu0 0
    %117 = vmatpush1.bf16.msra.mxu0 0
    %118 = vmatprep.subr.bf16.mxu0 0
    %119 = vmatpush1.bf16.msra.mxu0 0
    %120 = vmatprep.mubr.bf16.mxu0 0
    %121 = vmatmul.mubr.bf16.gmra.mrb[0].mxu0 %v86
    %v122 = vpop.f32.mrb[0].mxu0
    %v123 = vadd.f32 %v41, %v122
    %v124 = vpop.f32.mrb[0].mxu0
    %v125 = vpop.f32.mrb[0].mxu0
    %v126 = vadd.f32 %v41, %v125
    %v127 = vpop.f32.mrb[0].mxu0
    %128 = vdwg.mxu0
    %v129 = vld [vmem:[%s2] sm:$0xf]
    %v130 = vld [vmem:[%s2 + $0x4] sm:$0xf]
    %v131 = vld [vmem:[%s2 + $0x8] sm:$0xf]
    %v132 = vld [vmem:[%s2 + $0xc] sm:$0xf]
    %v133 = vld [vmem:[%s2 + $0x10] sm:$0xf]
    %v134 = vld [vmem:[%s2 + $0x14] sm:$0xf]
    %v135 = vld [vmem:[%s2 + $0x18] sm:$0xf]
    %v136 = vld [vmem:[%s2 + $0x1c] sm:$0xf]
    %v137 = vld [vmem:[%s2 + $0x20] sm:$0xf]
    %v138 = vld [vmem:[%s2 + $0x24] sm:$0xf]
    %v139 = vld [vmem:[%s2 + $0x28] sm:$0xf]
    %v140 = vld [vmem:[%s2 + $0x2c] sm:$0xf]
    %v141 = vld [vmem:[%s4] sm:$0x1]
    %v143 = vlaneseq
    %v144 = vshrl.u32 %v143, 7
    %v145 = vsub.s32 0, %v144
    %v146 = vrot.slane %v141, %v145
    %v160 = vunpack.c.l.b16 %v129
    %v161 = vunpack.c.l.b16 %v130
    %v162 = vunpack.c.l.b16 %v131
    %v163 = vunpack.c.l.b16 %v132
    %v164 = vunpack.c.l.b16 %v133
    %v165 = vunpack.c.l.b16 %v134
    %v166 = vunpack.c.l.b16 %v135
    %v167 = vunpack.c.l.b16 %v136
    %v168 = vunpack.c.l.b16 %v137
    %v169 = vunpack.c.l.b16 %v138
    %v170 = vunpack.c.l.b16 %v139
    %v171 = vunpack.c.l.b16 %v140
    %v172 = vpack.c.b16 %v161, %v160
    %v173 = vpack.c.b16 %v163, %v162
    %v174 = vpack.c.b16 %v165, %v164
    %v175 = vpack.c.b16 %v167, %v166
    %v176 = vpack.c.b16 %v169, %v168
    %v177 = vpack.c.b16 %v171, %v170
    %184 = vmatprep.subr.bf16.mxu0 0
    %185 = vmatpush1.bf16.msra.mxu0 %v172
    %186 = vmatprep.subr.bf16.mxu0 0
    %187 = vmatpush1.bf16.msra.mxu0 %v173
    %188 = vmatprep.subr.bf16.mxu0 0
    %189 = vmatpush1.bf16.msra.mxu0 %v174
    %190 = vmatprep.subr.bf16.mxu0 0
    %191 = vmatpush1.bf16.msra.mxu0 %v175
    %192 = vmatprep.subr.bf16.mxu0 0
    %193 = vmatpush1.bf16.msra.mxu0 %v176
    %194 = vmatprep.subr.bf16.mxu0 0
    %195 = vmatpush1.bf16.msra.mxu0 %v177
    %196 = vmatprep.subr.bf16.mxu0 0
    %197 = vmatpush1.bf16.msra.mxu0 0
    %198 = vmatprep.subr.bf16.mxu0 0
    %199 = vmatpush1.bf16.msra.mxu0 0
    %200 = vmatprep.subr.bf16.mxu0 0
    %201 = vmatpush1.bf16.msra.mxu0 0
    %202 = vmatprep.subr.bf16.mxu0 0
    %203 = vmatpush1.bf16.msra.mxu0 0
    %204 = vmatprep.subr.bf16.mxu0 0
    %205 = vmatpush1.bf16.msra.mxu0 0
    %206 = vmatprep.subr.bf16.mxu0 0
    %207 = vmatpush1.bf16.msra.mxu0 0
    %208 = vmatprep.subr.bf16.mxu0 0
    %209 = vmatpush1.bf16.msra.mxu0 0
    %210 = vmatprep.subr.bf16.mxu0 0
    %211 = vmatpush1.bf16.msra.mxu0 0
    %212 = vmatprep.subr.bf16.mxu0 0
    %213 = vmatpush1.bf16.msra.mxu0 0
    %214 = vmatprep.subr.bf16.mxu0 0
    %215 = vmatpush1.bf16.msra.mxu0 0
    %216 = vmatprep.mubr.bf16.mxu0 0
    %217 = vmatmul.mubr.bf16.gmra.mrb[0].mxu0 %v86
    %v218 = vpop.f32.mrb[0].mxu0
    %v219 = vadd.f32 %v146, %v218
    %v220 = vpop.f32.mrb[0].mxu0
    %v221 = vpop.f32.mrb[0].mxu0
    %v222 = vadd.f32 %v146, %v221
    %v223 = vpop.f32.mrb[0].mxu0
    %224 = vdwg.mxu0
    %v225 = vxor.u32 %v219, 2147483648
    %v226 = vxor.u32 %v222, 2147483648
    %v227 = vmul.f32 %v225, 1.442695
    %v228 = vpow.pop %v227
    %v229 = vmul.f32 %v226, 1.442695
    %v230 = vpow.pop %v229
    %v231 = vadd.f32 %v228, 1.0
    %v232 = vadd.f32 %v230, 1.0
    %v233 = vrcp.pop %v231
    %v234 = vmul.f32 1.0, %v233
    %v235 = vrcp.pop %v232
    %v236 = vmul.f32 1.0, %v235
    %v237 = vmul.f32 %v123, %v234
    %v238 = vmul.f32 %v126, %v236
    %v239 = vpack.c.bf16 %v238, %v237
    %v241 = vunpack.c.l.b16 %v239
    %v242 = vunpack.c.h.b16 %v239
    %v243 = vpack.c.b16 %v241, %v241
    %v244 = vpack.c.b16 %v242, %v242
    %vm247 = vcmask 257024
    %248 = vst.msk [vmem:[#allocation2] sm:$0xf] %vm247, %v243
    %249 = vst.msk [vmem:[#allocation2 + $0x4] sm:$0xf] %vm247, %v244
    // Predicated region
    $region22: #{tpu_custom_call.1} parent=1 // pred_check
      _
    $region23: #{tpu_custom_call.1} parent=1 // pred_check_branch
      %251 = sbr.rel (0) target = $region25
    $region24: #{tpu_custom_call.1} parent=1 // pred_region
      %s253 = ssub.s32 128, 128
      %254 = vsyncadd [#allocation3], %s253
      %s255 = sshll.u32 [#allocation2], 4
      %s256 = int_to_ptr.vmem [resolvable:$true] %s255
      %261 = dma.vmem_to_hbm [thread:$0]  %s256, 128, %s5, [#allocation3], 64, 64, 4
    $region25: #{tpu_custom_call.1} parent=1 // pred_fallthru
      _
    // Predicated region
    $region26: #{tpu_custom_call.1} parent=1 // pred_check
      _
    $region27: #{tpu_custom_call.1} parent=1 // pred_check_branch
      %263 = sbr.rel (0) target = $region29
    $region28: #{tpu_custom_call.1} parent=1 // pred_region
      %264 = dma.done [#allocation3], 128
    $region29: #{tpu_custom_call.1} parent=1 // pred_fallthru
      _
    %265 = vsyncpa [#allocation3], 1

</llo_original>
